<compile_context>
chip_gen: v5e
topology: v5e:2x2
jax: 0.10.0
libtpu: 0.0.40
codegen_flags: <defaults>
</compile_context>

<pallas_src>
import jax
import jax.numpy as jnp
from jax.experimental import pallas as pl
from jax.experimental.pallas import tpu as pltpu


def _round_up(a, b):
    return (a + b - 1) // b * b


def _pick_tile(n_pad, t_max, quantum):
    """Largest multiple of `quantum` that divides n_pad and is <= t_max
    (or n_pad itself if n_pad <= t_max)."""
    if n_pad <= t_max:
        return n_pad
    best = quantum
    t = quantum
    while t <= t_max:
        if n_pad % t == 0:
            best = t
        t += quantum
    return best


def _hgnn_kernel_tiled(l_ref, x_ref, wt_ref, out_ref, acc_ref):
    """K-tiled reduction over the vertex axis. grid = (row tiles i, reduction tiles k)."""
    k = pl.program_id(1)

    @pl.when(k == 0)
    def _():
        acc_ref[...] = jnp.zeros_like(acc_ref)

    # bf16 L/X tiles -> f32 MXU accumulation of (L @ [X | 1]).
    acc_ref[...] += jnp.dot(l_ref[...], x_ref[...], preferred_element_type=jnp.float32)

    @pl.when(k == pl.num_programs(1) - 1)
    def _():
        # Small fused projection epilogue: ([L@X | rowsum(L)]) @ [W^T ; b], then ReLU.
        z = jnp.dot(acc_ref[...], wt_ref[...], preferred_element_type=jnp.float32)
        out_ref[...] = jnp.maximum(z, 0.0).astype(out_ref.dtype)
        # TODO(synk): dropout (p=0.5) is identity in eval mode; training-mode dropout not emitted.
        # TODO(synk): use_bn=True (BatchNorm1d) path not emitted (module default use_bn=False).


def _hgnn_kernel_single(l_ref, x_ref, wt_ref, out_ref):
    """Single reduction step (tk == N_pad): no accumulator scratch, no pl.when branches."""
    y = jnp.dot(l_ref[...], x_ref[...], preferred_element_type=jnp.float32)
    z = jnp.dot(y, wt_ref[...], preferred_element_type=jnp.float32)
    out_ref[...] = jnp.maximum(z, 0.0).astype(out_ref.dtype)


def hgnn_conv(x, L, theta_w, theta_b, *, tn_max=512, tk_max=1024,
              stream_dtype=jnp.bfloat16, vmem_limit_bytes=None):
    """x: (N, C_in); L: (N, N) dense HGNN smoothing operator;
    theta_w: (C_out, C_in) nn.Linear weight; theta_b: (C_out,) bias."""
    N, C_in = x.shape
    C_out = theta_w.shape[0]
    assert L.shape == (N, N)

    # ---- wrapper-side layout prep (cheap XLA ops) --------------------------------
    # Fold the bias into the projection: ones column at lane C_in of X, bias row C_in
    # of Theta^T.  Pad channels to multiples of 128 (lane-dense MXU RHS / output).
    C_in_pad = _round_up(C_in + 1, 128)
    C_out_pad = _round_up(C_out, 128)

    # Pad N to a multiple of 128 (handles arbitrary graph sizes; padded rows give
    # ReLU(0)=0 and are sliced off).  Pick the largest tiles that divide N_pad.
    N_pad = _round_up(N, 128)
    tk = _pick_tile(N_pad, tk_max, 128)   # reduction tile (last dim of the L block)
    tn = _pick_tile(N_pad, tn_max, 8)     # row tile      (sublane dim of L / out blocks)
    grid = (N_pad // tn, N_pad // tk)

    # Dominant HBM stream (L) and X streamed in bf16; accumulation stays f32.
    L_p = jnp.zeros((N_pad, N_pad), stream_dtype).at[:N, :N].set(L.astype(stream_dtype))
    x_p = jnp.zeros((N_pad, C_in_pad), stream_dtype)
    x_p = x_p.at[:N, :C_in].set(x.astype(stream_dtype))
    x_p = x_p.at[:, C_in].set(1.0)                       # ones column -> bias via rowsum(L)
    wt_p = jnp.zeros((C_in_pad, C_out_pad), jnp.float32) # Theta^T, MXU-natural layout, f32
    wt_p = wt_p.at[:C_in, :C_out].set(theta_w.T.astype(jnp.float32))
    wt_p = wt_p.at[C_in, :C_out].set(theta_b.astype(jnp.float32))

    if grid[1] == 1:
        kernel = _hgnn_kernel_single
        scratch = []
    else:
        kernel = _hgnn_kernel_tiled
        scratch = [pltpu.VMEM((tn, C_in_pad), jnp.float32)]   # (L @ [X|1]) accumulator

    cp_kwargs = dict(
        # Row-tile axis carries no state -> megacore-parallel on v7x;
        # only the reduction axis is sequential (accumulator carry).
        dimension_semantics=("parallel", "arbitrary"),
    )
    if vmem_limit_bytes is not None:
        cp_kwargs["vmem_limit_bytes"] = vmem_limit_bytes

    out_full = pl.pallas_call(
        kernel,
        out_shape=jax.ShapeDtypeStruct((N_pad, C_out_pad), x.dtype),
        grid_spec=pltpu.PrefetchScalarGridSpec(
            num_scalar_prefetch=0,
            grid=grid,
            in_specs=[
                pl.BlockSpec((tn, tk), lambda i, k: (i, k)),              # L tile (dominant stream)
                pl.BlockSpec((tk, C_in_pad), lambda i, k: (k, 0)),        # [X | 1] reduction tile
                pl.BlockSpec((C_in_pad, C_out_pad), lambda i, k: (0, 0)), # [Theta^T ; b] (constant)
            ],
            out_specs=pl.BlockSpec((tn, C_out_pad), lambda i, k: (i, 0)),
            scratch_shapes=scratch,
        ),
        compiler_params=pltpu.CompilerParams(**cp_kwargs),
    )(L_p, x_p, wt_p)

    return out_full[:N, :C_out]


def build_hgnn_laplacian(key, num_v, num_e, dtype=jnp.float32):
    """Dense L_HGNN = D_v^{-1/2} H W_e D_e^{-1} H^T D_v^{-1/2} for a random hypergraph."""
    probs = jax.random.uniform(key, (num_v, num_e))
    H = (probs < 0.15).astype(dtype)
    # Guarantee non-zero degrees: vertex i always belongs to hyperedge (i mod num_e).
    anchor = (jnp.arange(num_e)[None, :] == (jnp.arange(num_v)[:, None] % num_e)).astype(dtype)
    H = jnp.maximum(H, anchor)
    w_e = jnp.ones((num_e,), dtype)                      # default hyperedge weights
    d_v = H @ w_e                                        # vertex degrees
    d_e = jnp.sum(H, axis=0)                             # hyperedge degrees
    Dv_inv_sqrt = 1.0 / jnp.sqrt(d_v)
    De_inv = 1.0 / d_e
    HW = H * (w_e * De_inv)[None, :]
    L = (Dv_inv_sqrt[:, None] * HW) @ (H.T * Dv_inv_sqrt[None, :])
    return L.astype(dtype)


if __name__ == "__main__":
    # Small, non-128-aligned shapes to exercise padding.
    N, C_in, C_out, M = 200, 48, 80, 64

    key = jax.random.PRNGKey(0)
    k_x, k_h, k_w, k_b = jax.random.split(key, 4)

    x = jax.random.normal(k_x, (N, C_in), jnp.float32)
    L = build_hgnn_laplacian(k_h, N, M)

    # nn.Linear(in_channels, out_channels): weight (C_out, C_in), bias (C_out,)
    bound = 1.0 / jnp.sqrt(jnp.float32(C_in))
    theta_w = jax.random.uniform(k_w, (C_out, C_in), jnp.float32, -bound, bound)
    theta_b = jax.random.uniform(k_b, (C_out,), jnp.float32, -bound, bound)

    # Pure-JAX f32 reference (module order of operations).
    ref = jnp.maximum(L @ (x @ theta_w.T + theta_b), 0.0)

    # Default path: single reduction step (tk == N_pad), bf16 L/X stream.
    out = jax.block_until_ready(hgnn_conv(x, L, theta_w, theta_b))
    assert out.shape == (N, C_out)
    assert jnp.allclose(out, ref, atol=3e-2, rtol=3e-2), float(jnp.max(jnp.abs(out - ref)))

    # Forced small tiles: exercises the K-tiled accumulator kernel + row/col padding.
    out2 = jax.block_until_ready(hgnn_conv(x, L, theta_w, theta_b, tn_max=64, tk_max=128))
    assert out2.shape == (N, C_out)
    assert jnp.allclose(out2, ref, atol=3e-2, rtol=3e-2), float(jnp.max(jnp.abs(out2 - ref)))

    print("KERNEL_OK")
</pallas_src>

<mosaic_0001>
module attributes {stable_mosaic.version = 11 : i64} {
  func.func @_hgnn_kernel_single(%arg0: i32, %arg1: i32, %arg2: memref<256x256xbf16, #tpu.memory_space<vmem>>, %arg3: memref<256x128xbf16, #tpu.memory_space<vmem>>, %arg4: memref<128x128xf32, #tpu.memory_space<vmem>>, %arg5: memref<256x128xf32, #tpu.memory_space<vmem>>) attributes {dimension_semantics = [#tpu.dimension_semantics<parallel>, #tpu.dimension_semantics<arbitrary>], iteration_bounds = array<i64: 1, 1>, scalar_prefetch = 0 : i64, scratch_operands = 0 : i64, tpu.core_type = #tpu.core_type<tc>, window_params = [{transform_indices = @transform_0, window_bounds = array<i64: 256, 256>}, {transform_indices = @transform_1, window_bounds = array<i64: 256, 128>}, {pipeline_mode = #tpu.pipeline_mode<synchronous>, transform_indices = @transform_2, window_bounds = array<i64: 128, 128>}, {transform_indices = @transform_3, window_bounds = array<i64: 256, 128>}]} {
    %c0 = arith.constant 0 : index
    %c0_0 = arith.constant 0 : index
    %0 = vector.load %arg2[%c0, %c0_0] : memref<256x256xbf16, #tpu.memory_space<vmem>>, vector<256x256xbf16>
    %c0_1 = arith.constant 0 : index
    %c0_2 = arith.constant 0 : index
    %1 = vector.load %arg3[%c0_1, %c0_2] : memref<256x128xbf16, #tpu.memory_space<vmem>>, vector<256x128xbf16>
    %cst = arith.constant dense<0.000000e+00> : vector<256x128xf32>
    %2 = tpu.matmul %0, %1, %cst {dimension_numbers = #tpu.dot_dimension_numbers<[1], [0], [0], [1], [0, 0, 1, 1], [], []>} : vector<256x256xbf16>, vector<256x128xbf16>, vector<256x128xf32> -> vector<256x128xf32>
    %c0_3 = arith.constant 0 : index
    %c0_4 = arith.constant 0 : index
    %3 = vector.load %arg4[%c0_3, %c0_4] : memref<128x128xf32, #tpu.memory_space<vmem>>, vector<128x128xf32>
    %cst_5 = arith.constant dense<0.000000e+00> : vector<256x128xf32>
    %4 = tpu.matmul %2, %3, %cst_5 {dimension_numbers = #tpu.dot_dimension_numbers<[1], [0], [0], [1], [0, 0, 1, 1], [], []>} : vector<256x128xf32>, vector<128x128xf32>, vector<256x128xf32> -> vector<256x128xf32>
    %cst_6 = arith.constant 0.000000e+00 : f32
    %5 = vector.broadcast %cst_6 : f32 to vector<256x128xf32>
    %6 = arith.maximumf %4, %5 : vector<256x128xf32>
    %c0_7 = arith.constant 0 : index
    %c0_8 = arith.constant 0 : index
    %7 = vector.load %arg5[%c0_7, %c0_8] : memref<256x128xf32, #tpu.memory_space<vmem>>, vector<256x128xf32>
    tpu.vector_store %arg5[%c0_7, %c0_8], %6 {strides = array<i32>} : memref<256x128xf32, #tpu.memory_space<vmem>>, vector<256x128xf32>,
    return
  }
  func.func @transform_0(%arg0: i32, %arg1: i32) -> (i32, i32) {
    %c0_i32 = arith.constant 0 : i32
    return %arg0, %arg1 : i32, i32
  }
  func.func @transform_1(%arg0: i32, %arg1: i32) -> (i32, i32) {
    %c0_i32 = arith.constant 0 : i32
    %c0_i32_0 = arith.constant 0 : i32
    return %arg1, %c0_i32 : i32, i32
  }
  func.func @transform_2(%arg0: i32, %arg1: i32) -> (i32, i32) {
    %c0_i32 = arith.constant 0 : i32
    %c0_i32_0 = arith.constant 0 : i32
    %c0_i32_1 = arith.constant 0 : i32
    return %c0_i32, %c0_i32_0 : i32, i32
  }
  func.func @transform_3(%arg0: i32, %arg1: i32) -> (i32, i32) {
    %c0_i32 = arith.constant 0 : i32
    %c0_i32_0 = arith.constant 0 : i32
    return %arg0, %c0_i32 : i32, i32
  }
}

</mosaic_0001>

<llo_original>
// kernel: tpu_custom_call.1
$region0: #{tpu_custom_call.1}
  #allocation0 [shape = 'u32[]', space=smem, size = 0x4, offset = 0x4, fixed_abs, tag = 'smem constant byte address 0x4 - core index']
  #allocation1 [shape = 'u32[72,128]{1,0:T(1,128)}', space=vmem, size = 0x9000, scoped, tag = 'internal scratch']
  %s0 = inlined_call_operand.hbm [shape: bf16[256,256], index: 0, kind: input, shape index: {}]
  %s1 = inlined_call_operand.hbm [shape: bf16[256,128], index: 1, kind: input, shape index: {}]
  %s2 = inlined_call_operand.hbm [shape: f32[128,128], index: 2, kind: input, shape index: {}]
  %s3 = inlined_call_operand.hbm [shape: f32[256,128], index: 3, kind: output, shape index: {}]
  %s4 = sld [smem:[#allocation0]]
  $region34: #{tpu_custom_call.1} parent=0
    _
  %s6 = ssub.s32 1, %s4
  %s7 = scalar_select 0, %s6, %s4
  $region1: #{tpu_custom_call.1} parent=0
    #allocation2 [shape = 'u8[131072]{0}', space=vmem, size = 0x20000, scoped, tag = 'input window, operand 0, single buffered']
    #allocation3 [shape = 's32[1]{0}', space=sflag, size = 0x4, scoped, tag = 'scoped memory for tpu_custom_call.1']
    #allocation4 [shape = 's32[1]{0}', space=sflag, size = 0x4, scoped, tag = 'scoped memory for tpu_custom_call.1']
    #allocation5 [shape = 'u8[65536]{0}', space=vmem, size = 0x10000, scoped, tag = 'input window, operand 1, single buffered']
    #allocation6 [shape = 's32[1]{0}', space=sflag, size = 0x4, scoped, tag = 'scoped memory for tpu_custom_call.1']
    #allocation7 [shape = 'u8[65536]{0}', space=vmem, size = 0x10000, scoped, tag = 'input window, operand 2, single buffered']
    #allocation8 [shape = 'u8[131072]{0}', space=vmem, size = 0x20000, scoped, tag = 'output window, operand 0, single buffered']
    %8 = vsyncpa [#allocation3], 0
    %9 = vsyncpa [#allocation6], 0
    %10 = vsyncpa [#allocation4], 0
    // Predicated region
    $region2: #{tpu_custom_call.1} parent=1 // pred_check
      _
    $region3: #{tpu_custom_call.1} parent=1 // pred_check_branch
      %12 = sbr.rel (0) target = $region5
    $region4: #{tpu_custom_call.1} parent=1 // pred_region
      %14 = vsyncadd [#allocation3], 0
      %s15 = sshll.u32 %s0, 4
      %s16 = int_to_ptr.hbm [resolvable:$true] %s15
      %s17 = sshll.u32 [#allocation2], 4
      %s18 = int_to_ptr.vmem [resolvable:$true] %s17
      %23 = dma.hbm_to_vmem [thread:$0]  %s16, 4096, %s18, [#allocation3], 128, 128, 8
    $region5: #{tpu_custom_call.1} parent=1 // pred_fallthru
      _
    // Predicated region
    $region6: #{tpu_custom_call.1} parent=1 // pred_check
      _
    $region7: #{tpu_custom_call.1} parent=1 // pred_check_branch
      %25 = sbr.rel (0) target = $region9
    $region8: #{tpu_custom_call.1} parent=1 // pred_region
      %27 = vsyncadd [#allocation6], 0
      %s28 = sshll.u32 %s1, 4
      %s29 = int_to_ptr.hbm [resolvable:$true] %s28
      %s30 = sshll.u32 [#allocation5], 4
      %s31 = int_to_ptr.vmem [resolvable:$true] %s30
      %36 = dma.hbm_to_vmem [thread:$0]  %s29, 2048, %s31, [#allocation6], 64, 64, 4
    $region9: #{tpu_custom_call.1} parent=1 // pred_fallthru
      _
    // Predicated region
    $region10: #{tpu_custom_call.1} parent=1 // pred_check
      _
    $region11: #{tpu_custom_call.1} parent=1 // pred_check_branch
      %38 = sbr.rel (0) target = $region13
    $region12: #{tpu_custom_call.1} parent=1 // pred_region
      %40 = vsyncadd [#allocation6], 0
      %s41 = sshll.u32 %s2, 4
      %s42 = int_to_ptr.hbm [resolvable:$true] %s41
      %s43 = sshll.u32 [#allocation7], 4
      %s44 = int_to_ptr.vmem [resolvable:$true] %s43
      %49 = dma.hbm_to_vmem [thread:$0]  %s42, 2048, %s44, [#allocation6], 128, 128, 8
    $region13: #{tpu_custom_call.1} parent=1 // pred_fallthru
      _
    // Predicated region
    $region14: #{tpu_custom_call.1} parent=1 // pred_check
      _
    $region15: #{tpu_custom_call.1} parent=1 // pred_check_branch
      %51 = sbr.rel (0) target = $region17
    $region16: #{tpu_custom_call.1} parent=1 // pred_region
      %53 = dma.done [#allocation3], 4096
    $region17: #{tpu_custom_call.1} parent=1 // pred_fallthru
      _
    // Predicated region
    $region18: #{tpu_custom_call.1} parent=1 // pred_check
      _
    $region19: #{tpu_custom_call.1} parent=1 // pred_check_branch
      %55 = sbr.rel (0) target = $region21
    $region20: #{tpu_custom_call.1} parent=1 // pred_region
      %57 = dma.done [#allocation6], 2048
    $region21: #{tpu_custom_call.1} parent=1 // pred_fallthru
      _
    // Predicated region
    $region22: #{tpu_custom_call.1} parent=1 // pred_check
      _
    $region23: #{tpu_custom_call.1} parent=1 // pred_check_branch
      %59 = sbr.rel (0) target = $region25
    $region24: #{tpu_custom_call.1} parent=1 // pred_region
      %61 = dma.done [#allocation6], 2048
    $region25: #{tpu_custom_call.1} parent=1 // pred_fallthru
      _
    %v62 = vld [vmem:[#allocation2] sm:$0xff]
    %v63 = vld [vmem:[#allocation2 + $0x8] sm:$0xff]
    %v64 = vld [vmem:[#allocation2 + $0x10] sm:$0xff]
    %v65 = vld [vmem:[#allocation2 + $0x18] sm:$0xff]
    %v66 = vld [vmem:[#allocation2 + $0x20] sm:$0xff]
    %v67 = vld [vmem:[#allocation2 + $0x28] sm:$0xff]
    %v68 = vld [vmem:[#allocation2 + $0x30] sm:$0xff]
    %v69 = vld [vmem:[#allocation2 + $0x38] sm:$0xff]
    %v70 = vld [vmem:[#allocation2 + $0x40] sm:$0xff]
    %v71 = vld [vmem:[#allocation2 + $0x48] sm:$0xff]
    %v72 = vld [vmem:[#allocation2 + $0x50] sm:$0xff]
    %v73 = vld [vmem:[#allocation2 + $0x58] sm:$0xff]
    %v74 = vld [vmem:[#allocation2 + $0x60] sm:$0xff]
    %v75 = vld [vmem:[#allocation2 + $0x68] sm:$0xff]
    %v76 = vld [vmem:[#allocation2 + $0x70] sm:$0xff]
    %v77 = vld [vmem:[#allocation2 + $0x78] sm:$0xff]
    %v78 = vld [vmem:[#allocation2 + $0x80] sm:$0xff]
    %v79 = vld [vmem:[#allocation2 + $0x88] sm:$0xff]
    %v80 = vld [vmem:[#allocation2 + $0x90] sm:$0xff]
    %v81 = vld [vmem:[#allocation2 + $0x98] sm:$0xff]
    %v82 = vld [vmem:[#allocation2 + $0xa0] sm:$0xff]
    %v83 = vld [vmem:[#allocation2 + $0xa8] sm:$0xff]
    %v84 = vld [vmem:[#allocation2 + $0xb0] sm:$0xff]
    %v85 = vld [vmem:[#allocation2 + $0xb8] sm:$0xff]
    %v86 = vld [vmem:[#allocation2 + $0xc0] sm:$0xff]
    %v87 = vld [vmem:[#allocation2 + $0xc8] sm:$0xff]
    %v88 = vld [vmem:[#allocation2 + $0xd0] sm:$0xff]
    %v89 = vld [vmem:[#allocation2 + $0xd8] sm:$0xff]
    %v90 = vld [vmem:[#allocation2 + $0xe0] sm:$0xff]
    %v91 = vld [vmem:[#allocation2 + $0xe8] sm:$0xff]
    %v92 = vld [vmem:[#allocation2 + $0xf0] sm:$0xff]
    %v93 = vld [vmem:[#allocation2 + $0xf8] sm:$0xff]
    %v94 = vld [vmem:[#allocation5] sm:$0xf]
    %v95 = vld [vmem:[#allocation5 + $0x4] sm:$0xf]
    %v96 = vld [vmem:[#allocation5 + $0x8] sm:$0xf]
    %v97 = vld [vmem:[#allocation5 + $0xc] sm:$0xf]
    %v98 = vld [vmem:[#allocation5 + $0x10] sm:$0xf]
    %v99 = vld [vmem:[#allocation5 + $0x14] sm:$0xf]
    %v100 = vld [vmem:[#allocation5 + $0x18] sm:$0xf]
    %v101 = vld [vmem:[#allocation5 + $0x1c] sm:$0xf]
    %v102 = vld [vmem:[#allocation5 + $0x20] sm:$0xf]
    %v103 = vld [vmem:[#allocation5 + $0x24] sm:$0xf]
    %v104 = vld [vmem:[#allocation5 + $0x28] sm:$0xf]
    %v105 = vld [vmem:[#allocation5 + $0x2c] sm:$0xf]
    %v106 = vld [vmem:[#allocation5 + $0x30] sm:$0xf]
    %v107 = vld [vmem:[#allocation5 + $0x34] sm:$0xf]
    %v108 = vld [vmem:[#allocation5 + $0x38] sm:$0xf]
    %v109 = vld [vmem:[#allocation5 + $0x3c] sm:$0xf]
    %v110 = vld [vmem:[#allocation5 + $0x40] sm:$0xf]
    %v111 = vld [vmem:[#allocation5 + $0x44] sm:$0xf]
    %v112 = vld [vmem:[#allocation5 + $0x48] sm:$0xf]
    %v113 = vld [vmem:[#allocation5 + $0x4c] sm:$0xf]
    %v114 = vld [vmem:[#allocation5 + $0x50] sm:$0xf]
    %v115 = vld [vmem:[#allocation5 + $0x54] sm:$0xf]
    %v116 = vld [vmem:[#allocation5 + $0x58] sm:$0xf]
    %v117 = vld [vmem:[#allocation5 + $0x5c] sm:$0xf]
    %v118 = vld [vmem:[#allocation5 + $0x60] sm:$0xf]
    %v119 = vld [vmem:[#allocation5 + $0x64] sm:$0xf]
    %v120 = vld [vmem:[#allocation5 + $0x68] sm:$0xf]
    %v121 = vld [vmem:[#allocation5 + $0x6c] sm:$0xf]
    %v122 = vld [vmem:[#allocation5 + $0x70] sm:$0xf]
    %v123 = vld [vmem:[#allocation5 + $0x74] sm:$0xf]
    %v124 = vld [vmem:[#allocation5 + $0x78] sm:$0xf]
    %v125 = vld [vmem:[#allocation5 + $0x7c] sm:$0xf]
    %v158 = vunpack.c.l.b16 %v62
    %v159 = vunpack.c.h.b16 %v62
    %v160 = vunpack.c.l.b16 %v63
    %v161 = vunpack.c.h.b16 %v63
    %v162 = vunpack.c.l.b16 %v64
    %v163 = vunpack.c.h.b16 %v64
    %v164 = vunpack.c.l.b16 %v65
    %v165 = vunpack.c.h.b16 %v65
    %v166 = vunpack.c.l.b16 %v66
    %v167 = vunpack.c.h.b16 %v66
    %v168 = vunpack.c.l.b16 %v67
    %v169 = vunpack.c.h.b16 %v67
    %v170 = vunpack.c.l.b16 %v68
    %v171 = vunpack.c.h.b16 %v68
    %v172 = vunpack.c.l.b16 %v69
    %v173 = vunpack.c.h.b16 %v69
    %v174 = vunpack.c.l.b16 %v70
    %v175 = vunpack.c.h.b16 %v70
    %v176 = vunpack.c.l.b16 %v71
    %v177 = vunpack.c.h.b16 %v71
    %v178 = vunpack.c.l.b16 %v72
    %v179 = vunpack.c.h.b16 %v72
    %v180 = vunpack.c.l.b16 %v73
    %v181 = vunpack.c.h.b16 %v73
    %v182 = vunpack.c.l.b16 %v74
    %v183 = vunpack.c.h.b16 %v74
    %v184 = vunpack.c.l.b16 %v75
    %v185 = vunpack.c.h.b16 %v75
    %v186 = vunpack.c.l.b16 %v76
    %v187 = vunpack.c.h.b16 %v76
    %v188 = vunpack.c.l.b16 %v77
    %v189 = vunpack.c.h.b16 %v77
    %v190 = vunpack.c.l.b16 %v78
    %v191 = vunpack.c.h.b16 %v78
    %v192 = vunpack.c.l.b16 %v79
    %v193 = vunpack.c.h.b16 %v79
    %v194 = vunpack.c.l.b16 %v80
    %v195 = vunpack.c.h.b16 %v80
    %v196 = vunpack.c.l.b16 %v81
    %v197 = vunpack.c.h.b16 %v81
    %v198 = vunpack.c.l.b16 %v82
    %v199 = vunpack.c.h.b16 %v82
    %v200 = vunpack.c.l.b16 %v83
    %v201 = vunpack.c.h.b16 %v83
    %v202 = vunpack.c.l.b16 %v84
    %v203 = vunpack.c.h.b16 %v84
    %v204 = vunpack.c.l.b16 %v85
    %v205 = vunpack.c.h.b16 %v85
    %v206 = vunpack.c.l.b16 %v86
    %v207 = vunpack.c.h.b16 %v86
    %v208 = vunpack.c.l.b16 %v87
    %v209 = vunpack.c.h.b16 %v87
    %v210 = vunpack.c.l.b16 %v88
    %v211 = vunpack.c.h.b16 %v88
    %v212 = vunpack.c.l.b16 %v89
    %v213 = vunpack.c.h.b16 %v89
    %v214 = vunpack.c.l.b16 %v90
    %v215 = vunpack.c.h.b16 %v90
    %v216 = vunpack.c.l.b16 %v91
    %v217 = vunpack.c.h.b16 %v91
    %v218 = vunpack.c.l.b16 %v92
    %v219 = vunpack.c.h.b16 %v92
    %v220 = vunpack.c.l.b16 %v93
    %v221 = vunpack.c.h.b16 %v93
    %v222 = vpack.c.b16 %v160, %v158
    %v223 = vpack.c.b16 %v161, %v159
    %v224 = vpack.c.b16 %v164, %v162
    %v225 = vpack.c.b16 %v165, %v163
    %v226 = vpack.c.b16 %v168, %v166
    %v227 = vpack.c.b16 %v169, %v167
    %v228 = vpack.c.b16 %v172, %v170
    %v229 = vpack.c.b16 %v173, %v171
    %v230 = vpack.c.b16 %v176, %v174
    %v231 = vpack.c.b16 %v177, %v175
    %v232 = vpack.c.b16 %v180, %v178
    %v233 = vpack.c.b16 %v181, %v179
    %v234 = vpack.c.b16 %v184, %v182
    %v235 = vpack.c.b16 %v185, %v183
    %v236 = vpack.c.b16 %v188, %v186
    %v237 = vpack.c.b16 %v189, %v187
    %v238 = vpack.c.b16 %v192, %v190
    %v239 = vpack.c.b16 %v193, %v191
    %v240 = vpack.c.b16 %v196, %v194
    %v241 = vpack.c.b16 %v197, %v195
    %v242 = vpack.c.b16 %v200, %v198
    %v243 = vpack.c.b16 %v201, %v199
    %v244 = vpack.c.b16 %v204, %v202
    %v245 = vpack.c.b16 %v205, %v203
    %v246 = vpack.c.b16 %v208, %v206
    %v247 = vpack.c.b16 %v209, %v207
    %v248 = vpack.c.b16 %v212, %v210
    %v249 = vpack.c.b16 %v213, %v211
    %v250 = vpack.c.b16 %v216, %v214
    %v251 = vpack.c.b16 %v217, %v215
    %v252 = vpack.c.b16 %v220, %v218
    %v253 = vpack.c.b16 %v221, %v219
    %v318 = vunpack.c.l.b16 %v94
    %v319 = vunpack.c.l.b16 %v95
    %v320 = vunpack.c.l.b16 %v96
    %v321 = vunpack.c.l.b16 %v97
    %v322 = vunpack.c.l.b16 %v98
    %v323 = vunpack.c.l.b16 %v99
    %v324 = vunpack.c.l.b16 %v100
    %v325 = vunpack.c.l.b16 %v101
    %v326 = vunpack.c.l.b16 %v102
    %v327 = vunpack.c.l.b16 %v103
    %v328 = vunpack.c.l.b16 %v104
    %v329 = vunpack.c.l.b16 %v105
    %v330 = vunpack.c.l.b16 %v106
    %v331 = vunpack.c.l.b16 %v107
    %v332 = vunpack.c.l.b16 %v108
    %v333 = vunpack.c.l.b16 %v109
    %v334 = vunpack.c.l.b16 %v110
    %v335 = vunpack.c.l.b16 %v111
    %v336 = vunpack.c.l.b16 %v112
    %v337 = vunpack.c.l.b16 %v113
    %v338 = vunpack.c.l.b16 %v114
    %v339 = vunpack.c.l.b16 %v115
    %v340 = vunpack.c.l.b16 %v116
    %v341 = vunpack.c.l.b16 %v117
    %v342 = vunpack.c.l.b16 %v118
    %v343 = vunpack.c.l.b16 %v119
    %v344 = vunpack.c.l.b16 %v120
    %v345 = vunpack.c.l.b16 %v121
    %v346 = vunpack.c.l.b16 %v122
    %v347 = vunpack.c.l.b16 %v123
    %v348 = vunpack.c.l.b16 %v124
    %v349 = vunpack.c.l.b16 %v125
    %v350 = vpack.c.b16 %v319, %v318
    %v351 = vpack.c.b16 %v321, %v320
    %v352 = vpack.c.b16 %v323, %v322
    %v353 = vpack.c.b16 %v325, %v324
    %v354 = vpack.c.b16 %v327, %v326
    %v355 = vpack.c.b16 %v329, %v328
    %v356 = vpack.c.b16 %v331, %v330
    %v357 = vpack.c.b16 %v333, %v332
    %v358 = vpack.c.b16 %v335, %v334
    %v359 = vpack.c.b16 %v337, %v336
    %v360 = vpack.c.b16 %v339, %v338
    %v361 = vpack.c.b16 %v341, %v340
    %v362 = vpack.c.b16 %v343, %v342
    %v363 = vpack.c.b16 %v345, %v344
    %v364 = vpack.c.b16 %v347, %v346
    %v365 = vpack.c.b16 %v349, %v348
    %382 = vmatpush.bf16.msra.mxu0 %v357
    %383 = vmatpush.bf16.msra.mxu0 %v356
    %384 = vmatpush.bf16.msra.mxu0 %v355
    %385 = vmatpush.bf16.msra.mxu0 %v354
    %386 = vmatpush.bf16.msra.mxu0 %v353
    %387 = vmatpush.bf16.msra.mxu0 %v352
    %388 = vmatpush.bf16.msra.mxu0 %v351
    %389 = vmatpush.bf16.msra.mxu0 %v350
    %390 = vmatmul.bf16.gmra.mxu0 %v222
    %v391 = vpop.f32.mrf.mxu0
    %v392 = vadd.f32 0.0, %v391
    %v393 = vpop.f32.mrf.mxu0
    %v394 = vadd.f32 0.0, %v393
    %395 = vmatmul.bf16.gmra.mxu0 %v224
    %v396 = vpop.f32.mrf.mxu0
    %v397 = vadd.f32 0.0, %v396
    %v398 = vpop.f32.mrf.mxu0
    %v399 = vadd.f32 0.0, %v398
    %400 = vmatmul.bf16.gmra.mxu0 %v226
    %v401 = vpop.f32.mrf.mxu0
    %v402 = vadd.f32 0.0, %v401
    %v403 = vpop.f32.mrf.mxu0
    %v404 = vadd.f32 0.0, %v403
    %405 = vmatmul.bf16.gmra.mxu0 %v228
    %v406 = vpop.f32.mrf.mxu0
    %v407 = vadd.f32 0.0, %v406
    %v408 = vpop.f32.mrf.mxu0
    %v409 = vadd.f32 0.0, %v408
    %410 = vmatmul.bf16.gmra.mxu0 %v230
    %v411 = vpop.f32.mrf.mxu0
    %v412 = vadd.f32 0.0, %v411
    %v413 = vpop.f32.mrf.mxu0
    %v414 = vadd.f32 0.0, %v413
    %415 = vmatmul.bf16.gmra.mxu0 %v232
    %v416 = vpop.f32.mrf.mxu0
    %v417 = vadd.f32 0.0, %v416
    %v418 = vpop.f32.mrf.mxu0
    %v419 = vadd.f32 0.0, %v418
    %420 = vmatmul.bf16.gmra.mxu0 %v234
    %v421 = vpop.f32.mrf.mxu0
    %v422 = vadd.f32 0.0, %v421
    %v423 = vpop.f32.mrf.mxu0
    %v424 = vadd.f32 0.0, %v423
    %425 = vmatmul.bf16.gmra.mxu0 %v236
    %v426 = vpop.f32.mrf.mxu0
    %v427 = vadd.f32 0.0, %v426
    %v428 = vpop.f32.mrf.mxu0
    %v429 = vadd.f32 0.0, %v428
    %430 = vmatmul.bf16.gmra.mxu0 %v238
    %v431 = vpop.f32.mrf.mxu0
    %v432 = vadd.f32 0.0, %v431
    %v433 = vpop.f32.mrf.mxu0
    %v434 = vadd.f32 0.0, %v433
    %435 = vmatmul.bf16.gmra.mxu0 %v240
    %v436 = vpop.f32.mrf.mxu0
    %v437 = vadd.f32 0.0, %v436
    %v438 = vpop.f32.mrf.mxu0
    %v439 = vadd.f32 0.0, %v438
    %440 = vmatmul.bf16.gmra.mxu0 %v242
    %v441 = vpop.f32.mrf.mxu0
    %v442 = vadd.f32 0.0, %v441
    %v443 = vpop.f32.mrf.mxu0
    %v444 = vadd.f32 0.0, %v443
    %445 = vmatmul.bf16.gmra.mxu0 %v244
    %v446 = vpop.f32.mrf.mxu0
    %v447 = vadd.f32 0.0, %v446
    %v448 = vpop.f32.mrf.mxu0
    %v449 = vadd.f32 0.0, %v448
    %450 = vmatmul.bf16.gmra.mxu0 %v246
    %v451 = vpop.f32.mrf.mxu0
    %v452 = vadd.f32 0.0, %v451
    %v453 = vpop.f32.mrf.mxu0
    %v454 = vadd.f32 0.0, %v453
    %455 = vmatmul.bf16.gmra.mxu0 %v248
    %v456 = vpop.f32.mrf.mxu0
    %v457 = vadd.f32 0.0, %v456
    %v458 = vpop.f32.mrf.mxu0
    %v459 = vadd.f32 0.0, %v458
    %460 = vmatmul.bf16.gmra.mxu0 %v250
    %v461 = vpop.f32.mrf.mxu0
    %v462 = vadd.f32 0.0, %v461
    %v463 = vpop.f32.mrf.mxu0
    %v464 = vadd.f32 0.0, %v463
    %465 = vmatmul.bf16.gmra.mxu0 %v252
    %v466 = vpop.f32.mrf.mxu0
    %v467 = vadd.f32 0.0, %v466
    %v468 = vpop.f32.mrf.mxu0
    %v469 = vadd.f32 0.0, %v468
    %470 = vdwg.mxu0
    %471 = vmatpush.bf16.msra.mxu0 %v365
    %472 = vmatpush.bf16.msra.mxu0 %v364
    %473 = vmatpush.bf16.msra.mxu0 %v363
    %474 = vmatpush.bf16.msra.mxu0 %v362
    %475 = vmatpush.bf16.msra.mxu0 %v361
    %476 = vmatpush.bf16.msra.mxu0 %v360
    %477 = vmatpush.bf16.msra.mxu0 %v359
    %478 = vmatpush.bf16.msra.mxu0 %v358
    %479 = vmatmul.bf16.gmra.mxu0 %v223
    %v480 = vpop.f32.mrf.mxu0
    %v481 = vadd.f32 %v392, %v480
    %v482 = vpop.f32.mrf.mxu0
    %v483 = vadd.f32 %v394, %v482
    %484 = vmatmul.bf16.gmra.mxu0 %v225
    %v485 = vpop.f32.mrf.mxu0
    %v486 = vadd.f32 %v397, %v485
    %v487 = vpop.f32.mrf.mxu0
    %v488 = vadd.f32 %v399, %v487
    %489 = vmatmul.bf16.gmra.mxu0 %v227
    %v490 = vpop.f32.mrf.mxu0
    %v491 = vadd.f32 %v402, %v490
    %v492 = vpop.f32.mrf.mxu0
    %v493 = vadd.f32 %v404, %v492
    %494 = vmatmul.bf16.gmra.mxu0 %v229
    %v495 = vpop.f32.mrf.mxu0
    %v496 = vadd.f32 %v407, %v495
    %v497 = vpop.f32.mrf.mxu0
    %v498 = vadd.f32 %v409, %v497
    %499 = vmatmul.bf16.gmra.mxu0 %v231
    %v500 = vpop.f32.mrf.mxu0
    %v501 = vadd.f32 %v412, %v500
    %v502 = vpop.f32.mrf.mxu0
    %v503 = vadd.f32 %v414, %v502
    %504 = vmatmul.bf16.gmra.mxu0 %v233
    %v505 = vpop.f32.mrf.mxu0
    %v506 = vadd.f32 %v417, %v505
    %v507 = vpop.f32.mrf.mxu0
    %v508 = vadd.f32 %v419, %v507
    %509 = vmatmul.bf16.gmra.mxu0 %v235
    %v510 = vpop.f32.mrf.mxu0
    %v511 = vadd.f32 %v422, %v510
    %v512 = vpop.f32.mrf.mxu0
    %v513 = vadd.f32 %v424, %v512
    %514 = vmatmul.bf16.gmra.mxu0 %v237
    %v515 = vpop.f32.mrf.mxu0
    %v516 = vadd.f32 %v427, %v515
    %v517 = vpop.f32.mrf.mxu0
    %v518 = vadd.f32 %v429, %v517
    %519 = vmatmul.bf16.gmra.mxu0 %v239
    %v520 = vpop.f32.mrf.mxu0
    %v521 = vadd.f32 %v432, %v520
    %v522 = vpop.f32.mrf.mxu0
    %v523 = vadd.f32 %v434, %v522
    %524 = vmatmul.bf16.gmra.mxu0 %v241
    %v525 = vpop.f32.mrf.mxu0
    %v526 = vadd.f32 %v437, %v525
    %v527 = vpop.f32.mrf.mxu0
    %v528 = vadd.f32 %v439, %v527
    %529 = vmatmul.bf16.gmra.mxu0 %v243
    %v530 = vpop.f32.mrf.mxu0
    %v531 = vadd.f32 %v442, %v530
    %v532 = vpop.f32.mrf.mxu0
    %v533 = vadd.f32 %v444, %v532
    %534 = vmatmul.bf16.gmra.mxu0 %v245
    %v535 = vpop.f32.mrf.mxu0
    %v536 = vadd.f32 %v447, %v535
    %v537 = vpop.f32.mrf.mxu0
    %v538 = vadd.f32 %v449, %v537
    %539 = vmatmul.bf16.gmra.mxu0 %v247
    %v540 = vpop.f32.mrf.mxu0
    %v541 = vadd.f32 %v452, %v540
    %v542 = vpop.f32.mrf.mxu0
    %v543 = vadd.f32 %v454, %v542
    %544 = vmatmul.bf16.gmra.mxu0 %v249
    %v545 = vpop.f32.mrf.mxu0
    %v546 = vadd.f32 %v457, %v545
    %v547 = vpop.f32.mrf.mxu0
    %v548 = vadd.f32 %v459, %v547
    %549 = vmatmul.bf16.gmra.mxu0 %v251
    %v550 = vpop.f32.mrf.mxu0
    %v551 = vadd.f32 %v462, %v550
    %v552 = vpop.f32.mrf.mxu0
    %v553 = vadd.f32 %v464, %v552
    %554 = vmatmul.bf16.gmra.mxu0 %v253
    %v555 = vpop.f32.mrf.mxu0
    %v556 = vadd.f32 %v467, %v555
    %v557 = vpop.f32.mrf.mxu0
    %v558 = vadd.f32 %v469, %v557
    %559 = vdwg.mxu0
    %v560 = vld [vmem:[#allocation7] sm:$0xff]
    %v561 = vld [vmem:[#allocation7 + $0x8] sm:$0xff]
    %v562 = vld [vmem:[#allocation7 + $0x10] sm:$0xff]
    %v563 = vld [vmem:[#allocation7 + $0x18] sm:$0xff]
    %v564 = vld [vmem:[#allocation7 + $0x20] sm:$0xff]
    %v565 = vld [vmem:[#allocation7 + $0x28] sm:$0xff]
    %v566 = vld [vmem:[#allocation7 + $0x30] sm:$0xff]
    %v567 = vld [vmem:[#allocation7 + $0x38] sm:$0xff]
    %v568 = vld [vmem:[#allocation7 + $0x40] sm:$0xff]
    %v569 = vld [vmem:[#allocation7 + $0x48] sm:$0xff]
    %v570 = vld [vmem:[#allocation7 + $0x50] sm:$0xff]
    %v571 = vld [vmem:[#allocation7 + $0x58] sm:$0xff]
    %v572 = vld [vmem:[#allocation7 + $0x60] sm:$0xff]
    %v573 = vld [vmem:[#allocation7 + $0x68] sm:$0xff]
    %v574 = vld [vmem:[#allocation7 + $0x70] sm:$0xff]
    %v575 = vld [vmem:[#allocation7 + $0x78] sm:$0xff]
    %576 = vmatpush.msra.mxu0 %v575
    %577 = vmatpush.msra.mxu0 %v574
    %578 = vmatpush.msra.mxu0 %v573
    %579 = vmatpush.msra.mxu0 %v572
    %580 = vmatpush.msra.mxu0 %v571
    %581 = vmatpush.msra.mxu0 %v570
    %582 = vmatpush.msra.mxu0 %v569
    %583 = vmatpush.msra.mxu0 %v568
    %584 = vmatpush.msra.mxu0 %v567
    %585 = vmatpush.msra.mxu0 %v566
    %586 = vmatpush.msra.mxu0 %v565
    %587 = vmatpush.msra.mxu0 %v564
    %588 = vmatpush.msra.mxu0 %v563
    %589 = vmatpush.msra.mxu0 %v562
    %590 = vmatpush.msra.mxu0 %v561
    %591 = vmatpush.msra.mxu0 %v560
    %592 = vmatmul.f32.gmra.mxu0 %v481
    %v593 = vpop.f32.mrf.mxu0
    %v594 = vadd.f32 0.0, %v593
    %595 = vmatmul.f32.gmra.mxu0 %v483
    %v596 = vpop.f32.mrf.mxu0
    %v597 = vadd.f32 0.0, %v596
    %598 = vmatmul.f32.gmra.mxu0 %v486
    %v599 = vpop.f32.mrf.mxu0
    %v600 = vadd.f32 0.0, %v599
    %601 = vmatmul.f32.gmra.mxu0 %v488
    %v602 = vpop.f32.mrf.mxu0
    %v603 = vadd.f32 0.0, %v602
    %604 = vmatmul.f32.gmra.mxu0 %v491
    %v605 = vpop.f32.mrf.mxu0
    %v606 = vadd.f32 0.0, %v605
    %607 = vmatmul.f32.gmra.mxu0 %v493
    %v608 = vpop.f32.mrf.mxu0
    %v609 = vadd.f32 0.0, %v608
    %610 = vmatmul.f32.gmra.mxu0 %v496
    %v611 = vpop.f32.mrf.mxu0
    %v612 = vadd.f32 0.0, %v611
    %613 = vmatmul.f32.gmra.mxu0 %v498
    %v614 = vpop.f32.mrf.mxu0
    %v615 = vadd.f32 0.0, %v614
    %616 = vmatmul.f32.gmra.mxu0 %v501
    %v617 = vpop.f32.mrf.mxu0
    %v618 = vadd.f32 0.0, %v617
    %619 = vmatmul.f32.gmra.mxu0 %v503
    %v620 = vpop.f32.mrf.mxu0
    %v621 = vadd.f32 0.0, %v620
    %622 = vmatmul.f32.gmra.mxu0 %v506
    %v623 = vpop.f32.mrf.mxu0
    %v624 = vadd.f32 0.0, %v623
    %625 = vmatmul.f32.gmra.mxu0 %v508
    %v626 = vpop.f32.mrf.mxu0
    %v627 = vadd.f32 0.0, %v626
    %628 = vmatmul.f32.gmra.mxu0 %v511
    %v629 = vpop.f32.mrf.mxu0
    %v630 = vadd.f32 0.0, %v629
    %631 = vmatmul.f32.gmra.mxu0 %v513
    %v632 = vpop.f32.mrf.mxu0
    %v633 = vadd.f32 0.0, %v632
    %634 = vmatmul.f32.gmra.mxu0 %v516
    %v635 = vpop.f32.mrf.mxu0
    %v636 = vadd.f32 0.0, %v635
    %637 = vmatmul.f32.gmra.mxu0 %v518
    %v638 = vpop.f32.mrf.mxu0
    %v639 = vadd.f32 0.0, %v638
    %640 = vmatmul.f32.gmra.mxu0 %v521
    %v641 = vpop.f32.mrf.mxu0
    %v642 = vadd.f32 0.0, %v641
    %643 = vmatmul.f32.gmra.mxu0 %v523
    %v644 = vpop.f32.mrf.mxu0
    %v645 = vadd.f32 0.0, %v644
    %646 = vmatmul.f32.gmra.mxu0 %v526
    %v647 = vpop.f32.mrf.mxu0
    %v648 = vadd.f32 0.0, %v647
    %649 = vmatmul.f32.gmra.mxu0 %v528
    %v650 = vpop.f32.mrf.mxu0
    %v651 = vadd.f32 0.0, %v650
    %652 = vmatmul.f32.gmra.mxu0 %v531
    %v653 = vpop.f32.mrf.mxu0
    %v654 = vadd.f32 0.0, %v653
    %655 = vmatmul.f32.gmra.mxu0 %v533
    %v656 = vpop.f32.mrf.mxu0
    %v657 = vadd.f32 0.0, %v656
    %658 = vmatmul.f32.gmra.mxu0 %v536
    %v659 = vpop.f32.mrf.mxu0
    %v660 = vadd.f32 0.0, %v659
    %661 = vmatmul.f32.gmra.mxu0 %v538
    %v662 = vpop.f32.mrf.mxu0
    %v663 = vadd.f32 0.0, %v662
    %664 = vmatmul.f32.gmra.mxu0 %v541
    %v665 = vpop.f32.mrf.mxu0
    %v666 = vadd.f32 0.0, %v665
    %667 = vmatmul.f32.gmra.mxu0 %v543
    %v668 = vpop.f32.mrf.mxu0
    %v669 = vadd.f32 0.0, %v668
    %670 = vmatmul.f32.gmra.mxu0 %v546
    %v671 = vpop.f32.mrf.mxu0
    %v672 = vadd.f32 0.0, %v671
    %673 = vmatmul.f32.gmra.mxu0 %v548
    %v674 = vpop.f32.mrf.mxu0
    %v675 = vadd.f32 0.0, %v674
    %676 = vmatmul.f32.gmra.mxu0 %v551
    %v677 = vpop.f32.mrf.mxu0
    %v678 = vadd.f32 0.0, %v677
    %679 = vmatmul.f32.gmra.mxu0 %v553
    %v680 = vpop.f32.mrf.mxu0
    %v681 = vadd.f32 0.0, %v680
    %682 = vmatmul.f32.gmra.mxu0 %v556
    %v683 = vpop.f32.mrf.mxu0
    %v684 = vadd.f32 0.0, %v683
    %685 = vmatmul.f32.gmra.mxu0 %v558
    %v686 = vpop.f32.mrf.mxu0
    %v687 = vadd.f32 0.0, %v686
    %688 = vdwg.mxu0
    %v689 = vmax.f32 %v594, 0.0
    %v690 = vmax.f32 %v597, 0.0
    %v691 = vmax.f32 %v600, 0.0
    %v692 = vmax.f32 %v603, 0.0
    %v693 = vmax.f32 %v606, 0.0
    %v694 = vmax.f32 %v609, 0.0
    %v695 = vmax.f32 %v612, 0.0
    %v696 = vmax.f32 %v615, 0.0
    %v697 = vmax.f32 %v618, 0.0
    %v698 = vmax.f32 %v621, 0.0
    %v699 = vmax.f32 %v624, 0.0
    %v700 = vmax.f32 %v627, 0.0
    %v701 = vmax.f32 %v630, 0.0
    %v702 = vmax.f32 %v633, 0.0
    %v703 = vmax.f32 %v636, 0.0
    %v704 = vmax.f32 %v639, 0.0
    %v705 = vmax.f32 %v642, 0.0
    %v706 = vmax.f32 %v645, 0.0
    %v707 = vmax.f32 %v648, 0.0
    %v708 = vmax.f32 %v651, 0.0
    %v709 = vmax.f32 %v654, 0.0
    %v710 = vmax.f32 %v657, 0.0
    %v711 = vmax.f32 %v660, 0.0
    %v712 = vmax.f32 %v663, 0.0
    %v713 = vmax.f32 %v666, 0.0
    %v714 = vmax.f32 %v669, 0.0
    %v715 = vmax.f32 %v672, 0.0
    %v716 = vmax.f32 %v675, 0.0
    %v717 = vmax.f32 %v678, 0.0
    %v718 = vmax.f32 %v681, 0.0
    %v719 = vmax.f32 %v684, 0.0
    %v720 = vmax.f32 %v687, 0.0
    %721 = vst [vmem:[#allocation8] sm:$0xff] %v689
    %722 = vst [vmem:[#allocation8 + $0x8] sm:$0xff] %v690
    %723 = vst [vmem:[#allocation8 + $0x10] sm:$0xff] %v691
    %724 = vst [vmem:[#allocation8 + $0x18] sm:$0xff] %v692
    %725 = vst [vmem:[#allocation8 + $0x20] sm:$0xff] %v693
    %726 = vst [vmem:[#allocation8 + $0x28] sm:$0xff] %v694
    %727 = vst [vmem:[#allocation8 + $0x30] sm:$0xff] %v695
    %728 = vst [vmem:[#allocation8 + $0x38] sm:$0xff] %v696
    %729 = vst [vmem:[#allocation8 + $0x40] sm:$0xff] %v697
    %730 = vst [vmem:[#allocation8 + $0x48] sm:$0xff] %v698
    %731 = vst [vmem:[#allocation8 + $0x50] sm:$0xff] %v699
    %732 = vst [vmem:[#allocation8 + $0x58] sm:$0xff] %v700
    %733 = vst [vmem:[#allocation8 + $0x60] sm:$0xff] %v701
    %734 = vst [vmem:[#allocation8 + $0x68] sm:$0xff] %v702
    %735 = vst [vmem:[#allocation8 + $0x70] sm:$0xff] %v703
    %736 = vst [vmem:[#allocation8 + $0x78] sm:$0xff] %v704
    %737 = vst [vmem:[#allocation8 + $0x80] sm:$0xff] %v705
    %738 = vst [vmem:[#allocation8 + $0x88] sm:$0xff] %v706
    %739 = vst [vmem:[#allocation8 + $0x90] sm:$0xff] %v707
    %740 = vst [vmem:[#allocation8 + $0x98] sm:$0xff] %v708
    %741 = vst [vmem:[#allocation8 + $0xa0] sm:$0xff] %v709
    %742 = vst [vmem:[#allocation8 + $0xa8] sm:$0xff] %v710
    %743 = vst [vmem:[#allocation8 + $0xb0] sm:$0xff] %v711
    %744 = vst [vmem:[#allocation8 + $0xb8] sm:$0xff] %v712
    %745 = vst [vmem:[#allocation8 + $0xc0] sm:$0xff] %v713
    %746 = vst [vmem:[#allocation8 + $0xc8] sm:$0xff] %v714
    %747 = vst [vmem:[#allocation8 + $0xd0] sm:$0xff] %v715
    %748 = vst [vmem:[#allocation8 + $0xd8] sm:$0xff] %v716
    %749 = vst [vmem:[#allocation8 + $0xe0] sm:$0xff] %v717
    %750 = vst [vmem:[#allocation8 + $0xe8] sm:$0xff] %v718
    %751 = vst [vmem:[#allocation8 + $0xf0] sm:$0xff] %v719
    %752 = vst [vmem:[#allocation8 + $0xf8] sm:$0xff] %v720
    // Predicated region
    $region26: #{tpu_custom_call.1} parent=1 // pred_check
      _
    $region27: #{tpu_custom_call.1} parent=1 // pred_check_branch
      %754 = sbr.rel (0) target = $region29
    $region28: #{tpu_custom_call.1} parent=1 // pred_region
      %756 = vsyncadd [#allocation4], 0
      %s757 = sshll.u32 [#allocation8], 4
      %s758 = int_to_ptr.vmem [resolvable:$true] %s757
      %s759 = sshll.u32 %s3, 4
      %s760 = int_to_ptr.hbm [resolvable:$true] %s759
      %765 = dma.vmem_to_hbm [thread:$0]  %s758, 4096, %s760, [#allocation4], 128, 128, 8
    $region29: #{tpu_custom_call.1} parent=1 // pred_fallthru
      _
    // Predicated region
    $region30: #{tpu_custom_call.1} parent=1 // pred_check
      _
    $region31: #{tpu_custom_call.1} parent=1 // pred_check_branch
      %767 = sbr.rel (0) target = $region33
    $region32: #{tpu_custom_call.1} parent=1 // pred_region
      %769 = dma.done [#allocation4], 4096
    $region33: #{tpu_custom_call.1} parent=1 // pred_fallthru
      _
    %770 = vsyncpa [#allocation3], 1
    %771 = vsyncpa [#allocation6], 1
    %772 = vsyncpa [#allocation4], 1

</llo_original>
